<compile_context>
chip_gen: v7x
topology: tpu7x:2x2x1
jax: 0.10.0
libtpu: 0.0.40
codegen_flags: <defaults>
</compile_context>

<pallas_src>
import functools

import jax
import jax.numpy as jnp
from jax import lax
from jax.experimental import pallas as pl
from jax.experimental.pallas import tpu as pltpu


LANE = 512              # lane-dense last-dim width (multiple of 128)
MAX_BLOCK_ROWS = 2048   # 2048 rows * 512 lanes * 4 B = 4 MiB per operand block
MIN_BLOCK_ROWS = 8      # sublane alignment


def _round_up(x, m):
    return -(-x // m) * m


def _leaky_relu_kernel(x_ref, o_ref, *, negative_slope):
    x = x_ref[...]
    o_ref[...] = jnp.where(x >= 0, x, negative_slope * x)


def _as_interleaved_f32(x):
    """complex64 (..., W) -> float32 (..., 2*W) with interleaved (re, im)."""
    try:
        return x.view(jnp.float32)
    except Exception:
        # Fallback with identical (numpy .view) semantics.
        re = jnp.real(x).astype(jnp.float32)
        im = jnp.imag(x).astype(jnp.float32)
        stacked = jnp.stack([re, im], axis=-1)            # (..., W, 2)
        return stacked.reshape(*x.shape[:-1], x.shape[-1] * 2)


def _as_complex64(xf):
    """float32 (..., 2*W) interleaved (re, im) -> complex64 (..., W)."""
    try:
        return xf.view(jnp.complex64)
    except Exception:
        pairs = xf.reshape(*xf.shape[:-1], xf.shape[-1] // 2, 2)
        return lax.complex(pairs[..., 0], pairs[..., 1])


@functools.partial(jax.jit, static_argnames=("negative_slope",))
def complex_leaky_relu(x, negative_slope=0.01):
    """x: complex64 array of any shape (e.g. NCHW). Returns complex64, same shape."""
    orig_shape = x.shape

    # Interleaved float32 view: (..., 2*W).
    # TODO(synk): if the .view() fallback path is ever taken, the interleave
    # materializes as an extra HBM pass on each side of the pallas_call.
    xf = _as_interleaved_f32(x)
    f_shape = xf.shape
    total = xf.size

    # Pad only to the (8, LANE) slab granularity (<= 16 KiB of pad, and a
    # no-op for power-of-two NCHW sizes); the ragged tail block is masked.
    rows = _round_up(pl.cdiv(total, LANE), MIN_BLOCK_ROWS)
    padded_total = rows * LANE

    flat = xf.reshape(-1)
    if padded_total != total:                 # no-op in the common case
        flat = jnp.pad(flat, (0, padded_total - total))
    slab = flat.reshape(rows, LANE)

    # Block size: up to 4 MiB, but keep >= 2 grid steps whenever possible so
    # the "parallel" axis can shard across both v7x TensorCores.
    block_rows = min(
        MAX_BLOCK_ROWS,
        max(MIN_BLOCK_ROWS, _round_up(pl.cdiv(rows, 2), MIN_BLOCK_ROWS)),
    )
    block_rows = min(block_rows, rows)
    grid = (pl.cdiv(rows, block_rows),)

    cost = pl.CostEstimate(
        flops=3 * padded_total,               # cmp + mul + select per f32
        transcendentals=0,
        bytes_accessed=2 * padded_total * 4,  # 1 read + 1 write
    )

    out = pl.pallas_call(
        functools.partial(_leaky_relu_kernel, negative_slope=negative_slope),
        out_shape=jax.ShapeDtypeStruct((rows, LANE), jnp.float32),
        grid=grid,
        in_specs=[pl.BlockSpec((block_rows, LANE), lambda i: (i, 0))],
        out_specs=pl.BlockSpec((block_rows, LANE), lambda i: (i, 0)),
        input_output_aliases={0: 0},
        compiler_params=pltpu.CompilerParams(
            dimension_semantics=("parallel",),
            vmem_limit_bytes=48 << 20,
        ),
        cost_estimate=cost,
    )(slab)

    out = out.reshape(-1)
    if padded_total != total:
        out = out[:total]
    out = out.reshape(f_shape)
    return _as_complex64(out).reshape(orig_shape)


if __name__ == "__main__":
    negative_slope = 0.01

    def make_complex(k, shape):
        k_re, k_im = jax.random.split(k)
        re = jax.random.normal(k_re, shape, dtype=jnp.float32)
        im = jax.random.normal(k_im, shape, dtype=jnp.float32)
        return lax.complex(re, im), re, im

    def ref(re, im):
        rr = jnp.where(re >= 0, re, negative_slope * re)
        ri = jnp.where(im >= 0, im, negative_slope * im)
        return lax.complex(rr, ri)

    # Primary shape (NCHW, matches the module's typical usage).
    shape = (2, 4, 16, 16)
    x, re, im = make_complex(jax.random.PRNGKey(0), shape)
    out = jax.block_until_ready(complex_leaky_relu(x, negative_slope=negative_slope))
    assert out.dtype == jnp.complex64
    assert out.shape == shape
    assert jnp.allclose(out, ref(re, im), atol=1e-6, rtol=1e-6)

    # Shape whose slab is not a multiple of block_rows: exercises the
    # cdiv-grid + masked partial tail block.
    shape2 = (2, 3, 32, 32)
    x2, re2, im2 = make_complex(jax.random.PRNGKey(1), shape2)
    out2 = jax.block_until_ready(complex_leaky_relu(x2, negative_slope=negative_slope))
    assert jnp.allclose(out2, ref(re2, im2), atol=1e-6, rtol=1e-6)

    # Ragged shape: exercises the minimal tail pad + slice path.
    shape3 = (3, 5, 7, 9)
    x3, re3, im3 = make_complex(jax.random.PRNGKey(2), shape3)
    out3 = jax.block_until_ready(complex_leaky_relu(x3, negative_slope=negative_slope))
    assert jnp.allclose(out3, ref(re3, im3), atol=1e-6, rtol=1e-6)

    print("KERNEL_OK")
</pallas_src>

<mosaic_0001>
module attributes {stable_mosaic.version = 11 : i64} {
  func.func @_leaky_relu_kernel(%arg0: i32, %arg1: memref<8x512xf32, #tpu.memory_space<vmem>>, %arg2: memref<8x512xf32, #tpu.memory_space<vmem>>) attributes {dimension_semantics = [#tpu.dimension_semantics<parallel>], iteration_bounds = array<i64: 1>, scalar_prefetch = 0 : i64, scratch_operands = 0 : i64, tpu.core_type = #tpu.core_type<tc>, window_params = [{transform_indices = @transform_0, window_bounds = array<i64: 8, 512>}, {transform_indices = @transform_1, window_bounds = array<i64: 8, 512>}]} {
    %c0 = arith.constant 0 : index
    %c0_0 = arith.constant 0 : index
    %0 = vector.load %arg1[%c0, %c0_0] : memref<8x512xf32, #tpu.memory_space<vmem>>, vector<8x512xf32>
    %cst = arith.constant 0.000000e+00 : f32
    %1 = vector.broadcast %cst : f32 to vector<8x512xf32>
    %2 = arith.cmpf oge, %0, %1 : vector<8x512xf32>
    %cst_1 = arith.constant 0.00999999977 : f32
    %3 = vector.broadcast %cst_1 : f32 to vector<8x512xf32>
    %4 = arith.mulf %3, %0 : vector<8x512xf32>
    %5 = arith.select %2, %0, %4 : vector<8x512xi1>, vector<8x512xf32>
    %c0_2 = arith.constant 0 : index
    %c0_3 = arith.constant 0 : index
    %6 = vector.load %arg2[%c0_2, %c0_3] : memref<8x512xf32, #tpu.memory_space<vmem>>, vector<8x512xf32>
    tpu.vector_store %arg2[%c0_2, %c0_3], %5 {strides = array<i32>} : memref<8x512xf32, #tpu.memory_space<vmem>>, vector<8x512xf32>,
    return
  }
  func.func @transform_0(%arg0: i32) -> (i32, i32) {
    %c0_i32 = arith.constant 0 : i32
    %c0_i32_0 = arith.constant 0 : i32
    return %arg0, %c0_i32 : i32, i32
  }
  func.func @transform_1(%arg0: i32) -> (i32, i32) {
    %c0_i32 = arith.constant 0 : i32
    %c0_i32_0 = arith.constant 0 : i32
    return %arg0, %c0_i32 : i32, i32
  }
}

</mosaic_0001>

<llo_original>
// kernel: custom-call
$region0: #{custom-call}
  %s0 = inlined_call_operand.hbm [shape: c64[2,4,16,16], index: 0, kind: input, shape index: {}]
  %s1 = inlined_call_operand.vmem [shape: f32[2,4,16,16], index: 1, kind: output, shape index: {}]
  $region1: #{custom-call} parent=0
    #allocation0 [shape = 's32[1]{0}', space=sflag, size = 0x4, scoped, tag = 'scoped memory for custom-call']
    %2 = vsyncpa [#allocation0], 0
    %s3 = sshll.u32 %s1, 4
    %s4 = int_to_ptr.vmem [resolvable:$true] %s3
    %6 = dma.hbm_to_vmem [thread:$0]  %s0, 2048, %s4, [#allocation0]
    %7 = dma.done [#allocation0], 2048
    %8 = vsyncpa [#allocation0], 1

// kernel: custom-call.1
$region0: #{custom-call.1}
  %s0 = inlined_call_operand.hbm [shape: c64[2,4,16,16], index: 0, kind: input, shape index: {}]
  %s1 = inlined_call_operand.vmem [shape: f32[2,4,16,16], index: 1, kind: output, shape index: {}]
  %s2 = scalar_lea.hbm %s0, 2048
  $region1: #{custom-call.1} parent=0
    #allocation0 [shape = 's32[1]{0}', space=sflag, size = 0x4, scoped, tag = 'scoped memory for custom-call.1']
    %3 = vsyncpa [#allocation0], 0
    %s4 = sshll.u32 %s1, 4
    %s5 = int_to_ptr.vmem [resolvable:$true] %s4
    %7 = dma.hbm_to_vmem [thread:$0]  %s2, 2048, %s5, [#allocation0]
    %8 = dma.done [#allocation0], 2048
    %9 = vsyncpa [#allocation0], 1

// kernel: complex_leaky_relu.1
$region0: #{complex_leaky_relu.1}
  #allocation0 [shape = 'u32[]', space=smem, size = 0x4, offset = 0x4, fixed_abs, tag = 'smem constant byte address 0x4 - core index']
  #allocation1 [shape = 'u32[144,128]{1,0:T(1,128)}', space=vmem, size = 0x12000, scoped, tag = 'internal scratch']
  %s0 = inlined_call_operand.vmem [shape: f32[8,512], index: 0, kind: input, shape index: {}, may-alias: {0,1}]
  %s1 = inlined_call_operand.vmem [shape: f32[8,512], index: 1, kind: output, shape index: {}, may-alias: {0,1}]
  %s2 = sld [smem:[#allocation0]]
  $region14: #{complex_leaky_relu.1} parent=0
    _
  %s4 = ssub.s32 1, %s2
  %s5 = scalar_select 0, %s4, %s2
  // Predicated region
  $region2: #{complex_leaky_relu.1} parent=0 // pred_check
    _
  $region3: #{complex_leaky_relu.1} parent=0 // pred_check_branch
    %7 = sbr.rel (0) target = $region5
  $region4: #{complex_leaky_relu.1} parent=0 // pred_region
    _
  $region5: #{complex_leaky_relu.1} parent=0 // pred_fallthru
    _
  %v8 = vld [vmem:[%s0] sm:$0xff]
  %v9 = vld [vmem:[%s0 + $0x8] sm:$0xff]
  %v10 = vld [vmem:[%s0 + $0x10] sm:$0xff]
  %v11 = vld [vmem:[%s0 + $0x18] sm:$0xff]
  %vm12 = vcmp.ge.f32.partialorder %v8, 0.0
  %vm13 = vcmp.ge.f32.partialorder %v9, 0.0
  %vm14 = vcmp.ge.f32.partialorder %v10, 0.0
  %vm15 = vcmp.ge.f32.partialorder %v11, 0.0
  %v16 = vmul.f32 %v8, 0.01
  %v17 = vmul.f32 %v9, 0.01
  %v18 = vmul.f32 %v10, 0.01
  %v19 = vmul.f32 %v11, 0.01
  %v20 = vsel %vm12, %v8, %v16
  %v21 = vsel %vm13, %v9, %v17
  %v22 = vsel %vm14, %v10, %v18
  %v23 = vsel %vm15, %v11, %v19
  %24 = vst [vmem:[%s1] sm:$0xff] %v20
  %25 = vst [vmem:[%s1 + $0x8] sm:$0xff] %v21
  %26 = vst [vmem:[%s1 + $0x10] sm:$0xff] %v22
  %27 = vst [vmem:[%s1 + $0x18] sm:$0xff] %v23
  // Predicated region
  $region6: #{complex_leaky_relu.1} parent=0 // pred_check
    _
  $region7: #{complex_leaky_relu.1} parent=0 // pred_check_branch
    %29 = sbr.rel (0) target = $region9
  $region8: #{complex_leaky_relu.1} parent=0 // pred_region
    _
  $region9: #{complex_leaky_relu.1} parent=0 // pred_fallthru
    _
  // Predicated region
  $region10: #{complex_leaky_relu.1} parent=0 // pred_check
    _
  $region11: #{complex_leaky_relu.1} parent=0 // pred_check_branch
    %31 = sbr.rel (0) target = $region13
  $region12: #{complex_leaky_relu.1} parent=0 // pred_region
    _
  $region13: #{complex_leaky_relu.1} parent=0 // pred_fallthru
    _

// kernel: custom-call.2
$region0: #{custom-call.2}
  %s0 = inlined_call_operand.vmem [shape: f32[2,4,16,16], index: 0, kind: input, shape index: {}]
  %s1 = inlined_call_operand.vmem [shape: f32[2,4,16,16], index: 1, kind: input, shape index: {}]
  %s2 = inlined_call_operand.hbm [shape: c64[2,4,16,16], index: 2, kind: output, shape index: {}]
  %s3 = scalar_lea.hbm %s2, 2048
  $region1: #{custom-call.2} parent=0
    #allocation0 [shape = 's32[1]{0}', space=sflag, size = 0x4, scoped, tag = 'scoped memory for custom-call.2']
    %4 = vsyncpa [#allocation0], 0
    %s5 = sshll.u32 %s0, 4
    %s6 = int_to_ptr.vmem [resolvable:$true] %s5
    %8 = dma.vmem_to_hbm [thread:$0]  %s6, 2048, %s2, [#allocation0]
    %9 = dma.done [#allocation0], 2048
    %10 = vsyncpa [#allocation0], 1
  $region2: #{custom-call.2} parent=0
    #allocation1 [shape = 's32[1]{0}', space=sflag, size = 0x4, scoped, tag = 'scoped memory for custom-call.2']
    %11 = vsyncpa [#allocation1], 0
    %s12 = sshll.u32 %s1, 4
    %s13 = int_to_ptr.vmem [resolvable:$true] %s12
    %15 = dma.vmem_to_hbm [thread:$0]  %s13, 2048, %s3, [#allocation1]
    %16 = dma.done [#allocation1], 2048
    %17 = vsyncpa [#allocation1], 1

</llo_original>
